<compile_context>
chip_gen: v5e
topology: v5e:2x2
jax: 0.10.0
libtpu: 0.0.40
codegen_flags: <defaults>
</compile_context>

<pallas_src>
import functools

import jax
import jax.numpy as jnp
from jax.experimental import pallas as pl
from jax.experimental.pallas import tpu as pltpu


def _projector_kernel(x_ref, w_ref, b_ref, o_ref):
    # x_ref: [TM, K]   tokens x vision_hidden (compute dtype, e.g. bf16)
    # w_ref: [K, TN]   pre-transposed weight tile (resident or streamed)
    # b_ref: [1, TN]   bias tile
    # o_ref: [TM, TN]  output tile (input dtype)
    acc = jnp.dot(x_ref[...], w_ref[...], preferred_element_type=jnp.float32)
    o_ref[...] = (acc + b_ref[...].astype(jnp.float32)).astype(o_ref.dtype)


def prepare_projector_weight(weight_nk, *, compute_dtype=jnp.bfloat16):
    """One-time transform of nn.Linear weight [out, in] -> [in, out].

    Cast to the MXU compute dtype and materialize NOW (device_put +
    block_until_ready) so a jitted forward never re-does the HBM
    transpose/cast per call.
    """
    w_kn = jnp.asarray(weight_nk).astype(compute_dtype).T
    w_kn = jax.device_put(w_kn)
    return jax.block_until_ready(w_kn)


def _round_up(x, m):
    return pl.cdiv(x, m) * m


def _sublane(dtype):
    # rows per vreg sublane group: f32 -> 8, bf16 -> 16, int8/fp8 -> 32
    return {4: 8, 2: 16, 1: 32}[jnp.dtype(dtype).itemsize]


def paligemma_mm_projector(x, w_kn, bias, *, tile_m=512, tile_n=None,
                           vmem_budget_bytes=None):
    """x: [B, S, K]; w_kn: [K, N] (pre-transposed, compute dtype); bias: [N].

    Returns [B, S, N] in x.dtype.
    """
    B, S, K = x.shape
    K2, N = w_kn.shape
    assert K == K2, "hidden size mismatch"
    assert bias.shape == (N,)
    M = B * S

    compute_dtype = w_kn.dtype        # bf16 by default (prepare_projector_weight)
    out_dtype = x.dtype               # preserve module output dtype

    # ---- VMEM budget (generation-aware, capped for v7x's 64 MiB/TC) ----
    if vmem_budget_bytes is None:
        try:
            info = pltpu.get_tpu_info()
            cap = getattr(info, "vmem_capacity_bytes", 128 * 1024 * 1024)
        except Exception:  # conservative fallback
            cap = 64 * 1024 * 1024
        vmem_budget_bytes = min(48 * 1024 * 1024, (int(cap) * 3) // 4)

    # ---- row (M) tile: multiple of the compute-dtype sublane count ----
    sublane = _sublane(compute_dtype)
    tile_m = _round_up(max(sublane, min(tile_m, _round_up(M, sublane))), sublane)

    # ---- column (N) tile: resident weight by default; streamed for small M ----
    if tile_n is None:
        if pl.cdiv(M, tile_m) <= 2 and N > 512 and N % 512 == 0:
            tile_n = 512              # small-M path: stream weight in N chunks
        else:
            tile_n = N                # weight fully resident in VMEM
    assert N % tile_n == 0, "tile_n must divide N"
    if tile_n != N:
        assert tile_n % 128 == 0 and tile_n >= 512, \
            "tiled N must be a multiple of 128 and >= 512 (lane-dense stores)"
    weight_resident = (tile_n == N)

    x_isz = jnp.dtype(compute_dtype).itemsize
    w_isz = jnp.dtype(w_kn.dtype).itemsize
    b_isz = jnp.dtype(bias.dtype).itemsize
    o_isz = jnp.dtype(out_dtype).itemsize

    def _footprint(tm):
        w_bufs = 1 if weight_resident else 2
        return (K * tile_n * w_isz * w_bufs          # weight
                + tile_n * b_isz * w_bufs            # bias
                + 2 * tm * K * x_isz                 # x (double-buffered)
                + 2 * tm * tile_n * o_isz)           # out (double-buffered)

    # Shrink tile_m until the pipeline fits comfortably inside the budget.
    while tile_m > sublane and _footprint(tile_m) > int(0.85 * vmem_budget_bytes):
        tile_m = max(sublane, _round_up(tile_m // 2, sublane))
    vmem_limit = max(vmem_budget_bytes, int(1.25 * _footprint(tile_m)))

    # ---- inputs (no padding: Pallas masks the partial last M block) ----
    x2d = x.reshape(M, K)
    if x2d.dtype != compute_dtype:
        x2d = x2d.astype(compute_dtype)
    b2d = bias.reshape(1, N)

    grid = (pl.cdiv(M, tile_m), N // tile_n)

    # Resident weight/bias: single buffer, constant block index.
    # Streamed weight/bias (N tiled, N is the fast grid axis): double buffer so
    # the next chunk's DMA overlaps the current tile's matmul.
    w_mode = pl.Buffered(1) if weight_resident else pl.Buffered(2)

    cost = pl.CostEstimate(
        flops=2 * M * K * N,
        transcendentals=0,
        bytes_accessed=(M * K * x_isz + K * N * w_isz + N * b_isz + M * N * o_isz),
    )

    out2d = pl.pallas_call(
        _projector_kernel,
        out_shape=jax.ShapeDtypeStruct((M, N), out_dtype),
        grid_spec=pltpu.PrefetchScalarGridSpec(
            num_scalar_prefetch=0,
            grid=grid,
            in_specs=[
                # x rows: pipelined (default double-buffered) over the M grid.
                pl.BlockSpec((tile_m, K), lambda i, j: (i, 0)),
                # weight: resident (Buffered(1)) or streamed (Buffered(2)).
                pl.BlockSpec((K, tile_n), lambda i, j: (0, j),
                             pipeline_mode=w_mode),
                # bias: same buffering policy as the weight (tiny either way).
                pl.BlockSpec((1, tile_n), lambda i, j: (0, j),
                             pipeline_mode=w_mode),
            ],
            out_specs=pl.BlockSpec((tile_m, tile_n), lambda i, j: (i, j)),
        ),
        compiler_params=pltpu.CompilerParams(
            # M axis parallel -> v7x's two TensorCores split M tiles;
            # no-op on single-TC v5e/v6e.
            dimension_semantics=("parallel", "parallel"),
            vmem_limit_bytes=vmem_limit,
        ),
        cost_estimate=cost,
    )(x2d, w_kn, b2d)

    return out2d.reshape(B, S, N)


if __name__ == "__main__":
    # Small synthetic config, lane-aligned (K, N multiples of 128) so stores
    # stay unmasked even at toy size:
    #   vision_config.hidden_size = 128, projection_dim = 256
    batch, seq, vision_hidden, projection_dim = 2, 8, 128, 256

    key = jax.random.PRNGKey(0)
    kx, kw, kb = jax.random.split(key, 3)

    x = jax.random.normal(kx, (batch, seq, vision_hidden), dtype=jnp.float32)
    # nn.Linear params in PyTorch layout: weight [out, in], bias [out].
    weight = jax.random.normal(kw, (projection_dim, vision_hidden),
                               dtype=jnp.float32) * 0.02
    bias = jax.random.normal(kb, (projection_dim,), dtype=jnp.float32) * 0.01

    proj = jax.jit(functools.partial(paligemma_mm_projector, tile_m=512))

    # --- default bf16-MXU path (recommended) ---------------------------------
    w_kn_bf16 = prepare_projector_weight(weight)           # one-time, at init
    y = jax.block_until_ready(proj(x, w_kn_bf16, bias))
    assert y.shape == (batch, seq, projection_dim)
    assert y.dtype == x.dtype
    # Reference computed from the same bf16-rounded operands, f32 accumulation.
    xb = x.astype(jnp.bfloat16).astype(jnp.float32)
    wb = weight.astype(jnp.bfloat16).astype(jnp.float32)
    y_ref_bf16 = jnp.einsum("bsh,ph->bsp", xb, wb,
                            precision=jax.lax.Precision.HIGHEST) + bias
    assert jnp.allclose(y, y_ref_bf16, atol=1e-2, rtol=1e-2)

    # --- f32 compute path (tight-precision check) ----------------------------
    w_kn_f32 = prepare_projector_weight(weight, compute_dtype=jnp.float32)
    y32 = jax.block_until_ready(proj(x, w_kn_f32, bias))
    y_ref = jnp.einsum("bsh,ph->bsp", x, weight,
                       precision=jax.lax.Precision.HIGHEST) + bias
    assert jnp.allclose(y32, y_ref, atol=1e-5, rtol=1e-5)

    print("KERNEL_OK")
</pallas_src>

<mosaic_0001>
module attributes {stable_mosaic.version = 11 : i64} {
  func.func @_projector_kernel(%arg0: i32, %arg1: i32, %arg2: memref<16x128xbf16, #tpu.memory_space<vmem>>, %arg3: memref<128x256xbf16, #tpu.memory_space<vmem>>, %arg4: memref<1x256xf32, #tpu.memory_space<vmem>>, %arg5: memref<16x256xf32, #tpu.memory_space<vmem>>) attributes {dimension_semantics = [#tpu.dimension_semantics<parallel>, #tpu.dimension_semantics<parallel>], iteration_bounds = array<i64: 1, 1>, scalar_prefetch = 0 : i64, scratch_operands = 0 : i64, tpu.core_type = #tpu.core_type<tc>, window_params = [{transform_indices = @transform_0, window_bounds = array<i64: 16, 128>}, {pipeline_mode = #tpu.pipeline_mode<synchronous>, transform_indices = @transform_1, window_bounds = array<i64: 128, 256>}, {pipeline_mode = #tpu.pipeline_mode<synchronous>, transform_indices = @transform_2, window_bounds = array<i64: 1, 256>}, {transform_indices = @transform_3, window_bounds = array<i64: 16, 256>}]} {
    %c0 = arith.constant 0 : index
    %c0_0 = arith.constant 0 : index
    %0 = vector.load %arg2[%c0, %c0_0] : memref<16x128xbf16, #tpu.memory_space<vmem>>, vector<16x128xbf16>
    %c0_1 = arith.constant 0 : index
    %c0_2 = arith.constant 0 : index
    %1 = vector.load %arg3[%c0_1, %c0_2] : memref<128x256xbf16, #tpu.memory_space<vmem>>, vector<128x256xbf16>
    %cst = arith.constant dense<0.000000e+00> : vector<16x256xf32>
    %2 = tpu.matmul %0, %1, %cst {dimension_numbers = #tpu.dot_dimension_numbers<[1], [0], [0], [1], [0, 0, 1, 1], [], []>} : vector<16x128xbf16>, vector<128x256xbf16>, vector<16x256xf32> -> vector<16x256xf32>
    %c0_3 = arith.constant 0 : index
    %c0_4 = arith.constant 0 : index
    %3 = vector.load %arg4[%c0_3, %c0_4] : memref<1x256xf32, #tpu.memory_space<vmem>>, vector<1x256xf32>
    %4 = vector.broadcast %3 : vector<1x256xf32> to vector<16x256xf32>
    %5 = arith.addf %2, %4 : vector<16x256xf32>
    %c0_5 = arith.constant 0 : index
    %c0_6 = arith.constant 0 : index
    %6 = vector.load %arg5[%c0_5, %c0_6] : memref<16x256xf32, #tpu.memory_space<vmem>>, vector<16x256xf32>
    tpu.vector_store %arg5[%c0_5, %c0_6], %5 {strides = array<i32>} : memref<16x256xf32, #tpu.memory_space<vmem>>, vector<16x256xf32>,
    return
  }
  func.func @transform_0(%arg0: i32, %arg1: i32) -> (i32, i32) {
    %c0_i32 = arith.constant 0 : i32
    %c0_i32_0 = arith.constant 0 : i32
    return %arg0, %c0_i32 : i32, i32
  }
  func.func @transform_1(%arg0: i32, %arg1: i32) -> (i32, i32) {
    %c0_i32 = arith.constant 0 : i32
    %c0_i32_0 = arith.constant 0 : i32
    return %c0_i32, %arg1 : i32, i32
  }
  func.func @transform_2(%arg0: i32, %arg1: i32) -> (i32, i32) {
    %c0_i32 = arith.constant 0 : i32
    %c0_i32_0 = arith.constant 0 : i32
    return %c0_i32, %arg1 : i32, i32
  }
  func.func @transform_3(%arg0: i32, %arg1: i32) -> (i32, i32) {
    %c0_i32 = arith.constant 0 : i32
    return %arg0, %arg1 : i32, i32
  }
}

</mosaic_0001>

<llo_original>
// kernel: paligemma_mm_projector.1
$region0: #{paligemma_mm_projector.1}
  #allocation0 [shape = 'u32[]', space=smem, size = 0x4, offset = 0x4, fixed_abs, tag = 'smem constant byte address 0x4 - core index']
  #allocation1 [shape = 'u32[72,128]{1,0:T(1,128)}', space=vmem, size = 0x9000, scoped, tag = 'internal scratch']
  %s0 = inlined_call_operand.vmem [shape: bf16[16,128], index: 0, kind: input, shape index: {}]
  %s1 = inlined_call_operand.hbm [shape: bf16[128,256], index: 1, kind: input, shape index: {}]
  %s2 = inlined_call_operand.vmem [shape: f32[1,256], index: 2, kind: input, shape index: {}]
  %s3 = inlined_call_operand.hbm [shape: f32[16,256], index: 3, kind: output, shape index: {}]
  %s4 = sld [smem:[#allocation0]]
  $region26: #{paligemma_mm_projector.1} parent=0
    _
  %s6 = ssub.s32 1, %s4
  %s7 = scalar_select 0, %s6, %s4
  $region1: #{paligemma_mm_projector.1} parent=0
    #allocation2 [shape = 'u8[65536]{0}', space=vmem, size = 0x10000, scoped, tag = 'input window, operand 1, single buffered']
    #allocation3 [shape = 's32[1]{0}', space=sflag, size = 0x4, scoped, tag = 'scoped memory for paligemma_mm_projector.1']
    #allocation4 [shape = 's32[1]{0}', space=sflag, size = 0x4, scoped, tag = 'scoped memory for paligemma_mm_projector.1']
    #allocation5 [shape = 'u8[16384]{0}', space=vmem, size = 0x4000, scoped, tag = 'output window, operand 0, single buffered']
    %8 = vsyncpa [#allocation3], 0
    %9 = vsyncpa [#allocation4], 0
    // Predicated region
    $region2: #{paligemma_mm_projector.1} parent=1 // pred_check
      _
    $region3: #{paligemma_mm_projector.1} parent=1 // pred_check_branch
      %11 = sbr.rel (0) target = $region5
    $region4: #{paligemma_mm_projector.1} parent=1 // pred_region
      _
    $region5: #{paligemma_mm_projector.1} parent=1 // pred_fallthru
      _
    // Predicated region
    $region6: #{paligemma_mm_projector.1} parent=1 // pred_check
      _
    $region7: #{paligemma_mm_projector.1} parent=1 // pred_check_branch
      %13 = sbr.rel (0) target = $region9
    $region8: #{paligemma_mm_projector.1} parent=1 // pred_region
      %15 = vsyncadd [#allocation3], 0
      %s16 = sshll.u32 %s1, 4
      %s17 = int_to_ptr.hbm [resolvable:$true] %s16
      %s18 = sshll.u32 [#allocation2], 4
      %s19 = int_to_ptr.vmem [resolvable:$true] %s18
      %24 = dma.hbm_to_vmem [thread:$0]  %s17, 2048, %s19, [#allocation3], 128, 128, 8
    $region9: #{paligemma_mm_projector.1} parent=1 // pred_fallthru
      _
    // Predicated region
    $region10: #{paligemma_mm_projector.1} parent=1 // pred_check
      _
    $region11: #{paligemma_mm_projector.1} parent=1 // pred_check_branch
      %26 = sbr.rel (0) target = $region13
    $region12: #{paligemma_mm_projector.1} parent=1 // pred_region
      _
    $region13: #{paligemma_mm_projector.1} parent=1 // pred_fallthru
      _
    // Predicated region
    $region14: #{paligemma_mm_projector.1} parent=1 // pred_check
      _
    $region15: #{paligemma_mm_projector.1} parent=1 // pred_check_branch
      %28 = sbr.rel (0) target = $region17
    $region16: #{paligemma_mm_projector.1} parent=1 // pred_region
      %30 = dma.done [#allocation3], 2048
    $region17: #{paligemma_mm_projector.1} parent=1 // pred_fallthru
      _
    %v31 = vld [vmem:[%s0] sm:$0xf]
    %v32 = vld [vmem:[%s0 + $0x4] sm:$0xf]
    %v33 = vld [vmem:[#allocation2] sm:$0xff]
    %v34 = vld [vmem:[#allocation2 + $0x8] sm:$0xff]
    %v35 = vld [vmem:[#allocation2 + $0x10] sm:$0xff]
    %v36 = vld [vmem:[#allocation2 + $0x18] sm:$0xff]
    %v37 = vld [vmem:[#allocation2 + $0x20] sm:$0xff]
    %v38 = vld [vmem:[#allocation2 + $0x28] sm:$0xff]
    %v39 = vld [vmem:[#allocation2 + $0x30] sm:$0xff]
    %v40 = vld [vmem:[#allocation2 + $0x38] sm:$0xff]
    %v41 = vld [vmem:[#allocation2 + $0x40] sm:$0xff]
    %v42 = vld [vmem:[#allocation2 + $0x48] sm:$0xff]
    %v43 = vld [vmem:[#allocation2 + $0x50] sm:$0xff]
    %v44 = vld [vmem:[#allocation2 + $0x58] sm:$0xff]
    %v45 = vld [vmem:[#allocation2 + $0x60] sm:$0xff]
    %v46 = vld [vmem:[#allocation2 + $0x68] sm:$0xff]
    %v47 = vld [vmem:[#allocation2 + $0x70] sm:$0xff]
    %v48 = vld [vmem:[#allocation2 + $0x78] sm:$0xff]
    %v49 = vld [vmem:[%s2] sm:$0x3]
    %v51 = vperm.slane %v49, 0
    %v52 = vperm.slane %v49, 1
    %v57 = vunpack.c.l.b16 %v31
    %v58 = vunpack.c.l.b16 %v32
    %v59 = vpack.c.b16 %v58, %v57
    %v77 = vunpack.c.l.b16 %v33
    %v78 = vunpack.c.h.b16 %v33
    %v79 = vunpack.c.l.b16 %v34
    %v80 = vunpack.c.h.b16 %v34
    %v81 = vunpack.c.l.b16 %v35
    %v82 = vunpack.c.h.b16 %v35
    %v83 = vunpack.c.l.b16 %v36
    %v84 = vunpack.c.h.b16 %v36
    %v85 = vunpack.c.l.b16 %v37
    %v86 = vunpack.c.h.b16 %v37
    %v87 = vunpack.c.l.b16 %v38
    %v88 = vunpack.c.h.b16 %v38
    %v89 = vunpack.c.l.b16 %v39
    %v90 = vunpack.c.h.b16 %v39
    %v91 = vunpack.c.l.b16 %v40
    %v92 = vunpack.c.h.b16 %v40
    %v93 = vunpack.c.l.b16 %v41
    %v94 = vunpack.c.h.b16 %v41
    %v95 = vunpack.c.l.b16 %v42
    %v96 = vunpack.c.h.b16 %v42
    %v97 = vunpack.c.l.b16 %v43
    %v98 = vunpack.c.h.b16 %v43
    %v99 = vunpack.c.l.b16 %v44
    %v100 = vunpack.c.h.b16 %v44
    %v101 = vunpack.c.l.b16 %v45
    %v102 = vunpack.c.h.b16 %v45
    %v103 = vunpack.c.l.b16 %v46
    %v104 = vunpack.c.h.b16 %v46
    %v105 = vunpack.c.l.b16 %v47
    %v106 = vunpack.c.h.b16 %v47
    %v107 = vunpack.c.l.b16 %v48
    %v108 = vunpack.c.h.b16 %v48
    %v109 = vpack.c.b16 %v79, %v77
    %v110 = vpack.c.b16 %v80, %v78
    %v111 = vpack.c.b16 %v83, %v81
    %v112 = vpack.c.b16 %v84, %v82
    %v113 = vpack.c.b16 %v87, %v85
    %v114 = vpack.c.b16 %v88, %v86
    %v115 = vpack.c.b16 %v91, %v89
    %v116 = vpack.c.b16 %v92, %v90
    %v117 = vpack.c.b16 %v95, %v93
    %v118 = vpack.c.b16 %v96, %v94
    %v119 = vpack.c.b16 %v99, %v97
    %v120 = vpack.c.b16 %v100, %v98
    %v121 = vpack.c.b16 %v103, %v101
    %v122 = vpack.c.b16 %v104, %v102
    %v123 = vpack.c.b16 %v107, %v105
    %v124 = vpack.c.b16 %v108, %v106
    %141 = vmatpush.bf16.msra.mxu0 %v123
    %142 = vmatpush.bf16.msra.mxu0 %v121
    %143 = vmatpush.bf16.msra.mxu0 %v119
    %144 = vmatpush.bf16.msra.mxu0 %v117
    %145 = vmatpush.bf16.msra.mxu0 %v115
    %146 = vmatpush.bf16.msra.mxu0 %v113
    %147 = vmatpush.bf16.msra.mxu0 %v111
    %148 = vmatpush.bf16.msra.mxu0 %v109
    %149 = vmatmul.bf16.gmra.mxu0 %v59
    %v150 = vpop.f32.mrf.mxu0
    %v151 = vadd.f32 %v51, %v150
    %v152 = vpop.f32.mrf.mxu0
    %v153 = vadd.f32 %v51, %v152
    %154 = vdwg.mxu0
    %155 = vmatpush.bf16.msra.mxu0 %v124
    %156 = vmatpush.bf16.msra.mxu0 %v122
    %157 = vmatpush.bf16.msra.mxu0 %v120
    %158 = vmatpush.bf16.msra.mxu0 %v118
    %159 = vmatpush.bf16.msra.mxu0 %v116
    %160 = vmatpush.bf16.msra.mxu0 %v114
    %161 = vmatpush.bf16.msra.mxu0 %v112
    %162 = vmatpush.bf16.msra.mxu0 %v110
    %163 = vmatmul.bf16.gmra.mxu0 %v59
    %v164 = vpop.f32.mrf.mxu0
    %v165 = vadd.f32 %v52, %v164
    %v166 = vpop.f32.mrf.mxu0
    %v167 = vadd.f32 %v52, %v166
    %168 = vdwg.mxu0
    %169 = vst [vmem:[#allocation5] sm:$0xff] %v151
    %170 = vst [vmem:[#allocation5 + $0x8] sm:$0xff] %v165
    %171 = vst [vmem:[#allocation5 + $0x10] sm:$0xff] %v153
    %172 = vst [vmem:[#allocation5 + $0x18] sm:$0xff] %v167
    // Predicated region
    $region18: #{paligemma_mm_projector.1} parent=1 // pred_check
      _
    $region19: #{paligemma_mm_projector.1} parent=1 // pred_check_branch
      %174 = sbr.rel (0) target = $region21
    $region20: #{paligemma_mm_projector.1} parent=1 // pred_region
      %176 = vsyncadd [#allocation4], 0
      %s177 = sshll.u32 [#allocation5], 4
      %s178 = int_to_ptr.vmem [resolvable:$true] %s177
      %s179 = sshll.u32 %s3, 4
      %s180 = int_to_ptr.hbm [resolvable:$true] %s179
      %185 = dma.vmem_to_hbm [thread:$0]  %s178, 512, %s180, [#allocation4], 256, 256, 16
    $region21: #{paligemma_mm_projector.1} parent=1 // pred_fallthru
      _
    // Predicated region
    $region22: #{paligemma_mm_projector.1} parent=1 // pred_check
      _
    $region23: #{paligemma_mm_projector.1} parent=1 // pred_check_branch
      %187 = sbr.rel (0) target = $region25
    $region24: #{paligemma_mm_projector.1} parent=1 // pred_region
      %189 = dma.done [#allocation4], 512
    $region25: #{paligemma_mm_projector.1} parent=1 // pred_fallthru
      _
    %190 = vsyncpa [#allocation3], 1
    %191 = vsyncpa [#allocation4], 1

</llo_original>
